<compile_context>
chip_gen: v7x
topology: tpu7x:2x2x1
jax: 0.10.0
libtpu: 0.0.40
codegen_flags: <defaults>
</compile_context>

<pallas_src>
import functools

import jax
import jax.numpy as jnp
from jax.experimental import pallas as pl
from jax.experimental.pallas import tpu as pltpu


def decoder_kernel(x_ref, w1_ref, b1_ref, w2_ref, b2_ref, o_ref):
    # dec1 + ReLU  (MXU matmul, f32 accumulation)
    h = jnp.dot(x_ref[...], w1_ref[...], preferred_element_type=jnp.float32)
    h = jnp.maximum(h + b1_ref[...], 0.0)

    # dec2
    y = jnp.dot(h, w2_ref[...], preferred_element_type=jnp.float32)
    y = y + b2_ref[...]

    # __relu_approx_sigmoid__ (identity matmuls are exact in fp32):
    #   relu(relu(0.25*y + 0.5) @ (-I) + 1) @ (-I) + 1
    # == 1 - relu(1 - relu(0.25*y + 0.5)) == clip(0.25*y + 0.5, 0, 1)
    o_ref[...] = jnp.clip(0.25 * y + 0.5, 0.0, 1.0).astype(o_ref.dtype)


@functools.partial(
    jax.jit, static_argnames=("block_b", "out_dtype", "vmem_limit_bytes")
)
def decoder_forward(x, w1, b1, w2, b2, *, block_b=1024,
                    out_dtype=jnp.float32, vmem_limit_bytes=None):
    """x: [B, F], w1: [F, 24], b1: [1, 24], w2: [24, 784], b2: [1, 784]."""
    B, F = x.shape
    H1 = w1.shape[1]
    H2 = w2.shape[1]

    # Pick a batch tile: either the full batch (single step) or a multiple of 8
    # (second-to-last block dim must be a multiple of 8 unless it spans the
    # whole array).
    if B <= block_b:
        TB = B
    else:
        TB = (block_b // 8) * 8
        TB = max(TB, 8)

    # Pad batch up to a multiple of TB so every grid step sees a full tile.
    num_tiles = pl.cdiv(B, TB)
    Bp = num_tiles * TB
    if Bp != B:
        x = jnp.pad(x, ((0, Bp - B), (0, 0)))

    flops = 2 * Bp * (F * H1 + H1 * H2)
    bytes_accessed = (
        Bp * F * 4                                   # x read
        + (F * H1 + H1 + H1 * H2 + H2) * 4           # weights/biases read
        + Bp * H2 * jnp.dtype(out_dtype).itemsize    # output written
    )

    compiler_params = pltpu.CompilerParams(
        dimension_semantics=("parallel",),
        vmem_limit_bytes=vmem_limit_bytes,
    )

    out = pl.pallas_call(
        decoder_kernel,
        out_shape=jax.ShapeDtypeStruct((Bp, H2), out_dtype),
        grid=(num_tiles,),
        in_specs=[
            pl.BlockSpec((TB, F), lambda i: (i, 0)),    # x: tiled over batch
            pl.BlockSpec((F, H1), lambda i: (0, 0)),    # W1: resident
            pl.BlockSpec((1, H1), lambda i: (0, 0)),    # b1: resident
            pl.BlockSpec((H1, H2), lambda i: (0, 0)),   # W2: resident
            pl.BlockSpec((1, H2), lambda i: (0, 0)),    # b2: resident
        ],
        out_specs=pl.BlockSpec((TB, H2), lambda i: (i, 0)),
        compiler_params=compiler_params,
        cost_estimate=pl.CostEstimate(
            flops=flops, transcendentals=0, bytes_accessed=bytes_accessed
        ),
    )(x, w1, b1, w2, b2)

    if Bp != B:
        out = out[:B]
    return out


def reference_forward(x, w1, b1, w2, b2):
    """Pure-JAX reference matching the PyTorch module exactly (with explicit
    identity matmuls)."""
    h = jax.nn.relu(x @ w1 + b1)
    y = h @ w2 + b2
    n = y.shape[-1]
    I = jnp.eye(n, dtype=jnp.float32)
    ones = jnp.ones((n,), dtype=jnp.float32)
    return (
        jax.nn.relu(jax.nn.relu(y @ (0.25 * I) + (ones - 0.5)) @ (-I) + ones)
        @ (-I)
        + ones
    )


if __name__ == "__main__":
    features = 8          # latent dim of the VAE decoder
    batch = 2

    key = jax.random.PRNGKey(0)
    kx, k1, k2, k3, k4 = jax.random.split(key, 5)

    # Deterministic synthetic parameters
    # (PyTorch Linear init range ~U(-1/sqrt(in), 1/sqrt(in)))
    x = jax.random.normal(kx, (batch, features), dtype=jnp.float32)
    lim1 = 1.0 / jnp.sqrt(features)
    lim2 = 1.0 / jnp.sqrt(24.0)
    w1 = jax.random.uniform(k1, (features, 24), jnp.float32, -lim1, lim1)
    b1 = jax.random.uniform(k2, (1, 24), jnp.float32, -lim1, lim1)
    w2 = jax.random.uniform(k3, (24, 784), jnp.float32, -lim2, lim2)
    b2 = jax.random.uniform(k4, (1, 784), jnp.float32, -lim2, lim2)

    out = decoder_forward(x, w1, b1, w2, b2)
    out = jax.block_until_ready(out)

    ref = reference_forward(x, w1, b1[0], w2, b2[0])
    assert out.shape == (batch, 784), out.shape
    assert jnp.allclose(out, ref, atol=1e-5, rtol=1e-5), float(
        jnp.max(jnp.abs(out - ref))
    )

    print("KERNEL_OK")
</pallas_src>

<mosaic_0001>
module attributes {stable_mosaic.version = 11 : i64} {
  func.func @decoder_kernel(%arg0: i32, %arg1: memref<2x8xf32, #tpu.memory_space<vmem>>, %arg2: memref<8x24xf32, #tpu.memory_space<vmem>>, %arg3: memref<1x24xf32, #tpu.memory_space<vmem>>, %arg4: memref<24x784xf32, #tpu.memory_space<vmem>>, %arg5: memref<1x784xf32, #tpu.memory_space<vmem>>, %arg6: memref<2x784xf32, #tpu.memory_space<vmem>>) attributes {dimension_semantics = [#tpu.dimension_semantics<parallel>], iteration_bounds = array<i64: 1>, scalar_prefetch = 0 : i64, scratch_operands = 0 : i64, tpu.core_type = #tpu.core_type<tc>, window_params = [{transform_indices = @transform_0, window_bounds = array<i64: 2, 8>}, {pipeline_mode = #tpu.pipeline_mode<synchronous>, transform_indices = @transform_1, window_bounds = array<i64: 8, 24>}, {pipeline_mode = #tpu.pipeline_mode<synchronous>, transform_indices = @transform_2, window_bounds = array<i64: 1, 24>}, {pipeline_mode = #tpu.pipeline_mode<synchronous>, transform_indices = @transform_3, window_bounds = array<i64: 24, 784>}, {pipeline_mode = #tpu.pipeline_mode<synchronous>, transform_indices = @transform_4, window_bounds = array<i64: 1, 784>}, {transform_indices = @transform_5, window_bounds = array<i64: 2, 784>}]} {
    %c0 = arith.constant 0 : index
    %c0_0 = arith.constant 0 : index
    %0 = vector.load %arg1[%c0, %c0_0] : memref<2x8xf32, #tpu.memory_space<vmem>>, vector<2x8xf32>
    %c0_1 = arith.constant 0 : index
    %c0_2 = arith.constant 0 : index
    %1 = vector.load %arg2[%c0_1, %c0_2] : memref<8x24xf32, #tpu.memory_space<vmem>>, vector<8x24xf32>
    %cst = arith.constant dense<0.000000e+00> : vector<2x24xf32>
    %2 = tpu.matmul %0, %1, %cst {dimension_numbers = #tpu.dot_dimension_numbers<[1], [0], [0], [1], [0, 0, 1, 1], [], []>} : vector<2x8xf32>, vector<8x24xf32>, vector<2x24xf32> -> vector<2x24xf32>
    %c0_3 = arith.constant 0 : index
    %c0_4 = arith.constant 0 : index
    %3 = vector.load %arg3[%c0_3, %c0_4] : memref<1x24xf32, #tpu.memory_space<vmem>>, vector<1x24xf32>
    %4 = vector.broadcast %3 : vector<1x24xf32> to vector<2x24xf32>
    %5 = arith.addf %2, %4 : vector<2x24xf32>
    %cst_5 = arith.constant 0.000000e+00 : f32
    %6 = vector.broadcast %cst_5 : f32 to vector<2x24xf32>
    %7 = arith.maximumf %5, %6 : vector<2x24xf32>
    %c0_6 = arith.constant 0 : index
    %c0_7 = arith.constant 0 : index
    %8 = vector.load %arg4[%c0_6, %c0_7] : memref<24x784xf32, #tpu.memory_space<vmem>>, vector<24x784xf32>
    %cst_8 = arith.constant dense<0.000000e+00> : vector<2x784xf32>
    %9 = tpu.matmul %7, %8, %cst_8 {dimension_numbers = #tpu.dot_dimension_numbers<[1], [0], [0], [1], [0, 0, 1, 1], [], []>} : vector<2x24xf32>, vector<24x784xf32>, vector<2x784xf32> -> vector<2x784xf32>
    %c0_9 = arith.constant 0 : index
    %c0_10 = arith.constant 0 : index
    %10 = vector.load %arg5[%c0_9, %c0_10] : memref<1x784xf32, #tpu.memory_space<vmem>>, vector<1x784xf32>
    %11 = vector.broadcast %10 : vector<1x784xf32> to vector<2x784xf32>
    %12 = arith.addf %9, %11 : vector<2x784xf32>
    %cst_11 = arith.constant 2.500000e-01 : f32
    %13 = vector.broadcast %cst_11 : f32 to vector<2x784xf32>
    %14 = arith.mulf %13, %12 : vector<2x784xf32>
    %cst_12 = arith.constant 5.000000e-01 : f32
    %15 = vector.broadcast %cst_12 : f32 to vector<2x784xf32>
    %16 = arith.addf %14, %15 : vector<2x784xf32>
    %cst_13 = arith.constant 0.000000e+00 : f32
    %cst_14 = arith.constant 1.000000e+00 : f32
    %17 = vector.broadcast %cst_13 : f32 to vector<2x784xf32>
    %18 = arith.maximumf %17, %16 : vector<2x784xf32>
    %19 = vector.broadcast %cst_14 : f32 to vector<2x784xf32>
    %20 = arith.minimumf %19, %18 : vector<2x784xf32>
    %c0_15 = arith.constant 0 : index
    %c0_16 = arith.constant 0 : index
    %21 = vector.load %arg6[%c0_15, %c0_16] : memref<2x784xf32, #tpu.memory_space<vmem>>, vector<2x784xf32>
    tpu.vector_store %arg6[%c0_15, %c0_16], %20 {strides = array<i32>} : memref<2x784xf32, #tpu.memory_space<vmem>>, vector<2x784xf32>,
    return
  }
  func.func @transform_0(%arg0: i32) -> (i32, i32) {
    %c0_i32 = arith.constant 0 : i32
    %c0_i32_0 = arith.constant 0 : i32
    return %arg0, %c0_i32 : i32, i32
  }
  func.func @transform_1(%arg0: i32) -> (i32, i32) {
    %c0_i32 = arith.constant 0 : i32
    %c0_i32_0 = arith.constant 0 : i32
    %c0_i32_1 = arith.constant 0 : i32
    return %c0_i32, %c0_i32_0 : i32, i32
  }
  func.func @transform_2(%arg0: i32) -> (i32, i32) {
    %c0_i32 = arith.constant 0 : i32
    %c0_i32_0 = arith.constant 0 : i32
    %c0_i32_1 = arith.constant 0 : i32
    return %c0_i32, %c0_i32_0 : i32, i32
  }
  func.func @transform_3(%arg0: i32) -> (i32, i32) {
    %c0_i32 = arith.constant 0 : i32
    %c0_i32_0 = arith.constant 0 : i32
    %c0_i32_1 = arith.constant 0 : i32
    return %c0_i32, %c0_i32_0 : i32, i32
  }
  func.func @transform_4(%arg0: i32) -> (i32, i32) {
    %c0_i32 = arith.constant 0 : i32
    %c0_i32_0 = arith.constant 0 : i32
    %c0_i32_1 = arith.constant 0 : i32
    return %c0_i32, %c0_i32_0 : i32, i32
  }
  func.func @transform_5(%arg0: i32) -> (i32, i32) {
    %c0_i32 = arith.constant 0 : i32
    %c0_i32_0 = arith.constant 0 : i32
    return %arg0, %c0_i32 : i32, i32
  }
}

</mosaic_0001>

<llo_original>
// kernel: decoder_forward.1
$region0: #{decoder_forward.1}
  #allocation0 [shape = 'u32[]', space=smem, size = 0x4, offset = 0x4, fixed_abs, tag = 'smem constant byte address 0x4 - core index']
  #allocation1 [shape = 'u32[144,128]{1,0:T(1,128)}', space=vmem, size = 0x12000, scoped, tag = 'internal scratch']
  %s0 = inlined_call_operand.hbm [shape: f32[2,8], index: 0, kind: input, shape index: {}]
  %s1 = inlined_call_operand.hbm [shape: f32[8,24], index: 1, kind: input, shape index: {}]
  %s2 = inlined_call_operand.vmem [shape: f32[1,24], index: 2, kind: input, shape index: {}]
  %s3 = inlined_call_operand.hbm [shape: f32[24,784], index: 3, kind: input, shape index: {}]
  %s4 = inlined_call_operand.vmem [shape: f32[1,784], index: 4, kind: input, shape index: {}]
  %s5 = inlined_call_operand.hbm [shape: f32[2,784], index: 5, kind: output, shape index: {}]
  %s6 = sld [smem:[#allocation0]]
  $region42: #{decoder_forward.1} parent=0
    _
  %s8 = ssub.s32 1, %s6
  %s9 = scalar_select 0, %s8, %s6
  $region1: #{decoder_forward.1} parent=0
    #allocation2 [shape = 'u8[1024]{0}', space=vmem, size = 0x400, scoped, tag = 'input window, operand 0, single buffered']
    #allocation3 [shape = 's32[1]{0}', space=sflag, size = 0x4, scoped, tag = 'scoped memory for decoder_forward.1']
    #allocation4 [shape = 's32[1]{0}', space=sflag, size = 0x4, scoped, tag = 'scoped memory for decoder_forward.1']
    #allocation5 [shape = 'u8[4096]{0}', space=vmem, size = 0x1000, scoped, tag = 'input window, operand 1, single buffered']
    #allocation6 [shape = 's32[1]{0}', space=sflag, size = 0x4, scoped, tag = 'scoped memory for decoder_forward.1']
    #allocation7 [shape = 'u8[86016]{0}', space=vmem, size = 0x15000, scoped, tag = 'input window, operand 3, single buffered']
    #allocation8 [shape = 'u8[7168]{0}', space=vmem, size = 0x1c00, scoped, tag = 'output window, operand 0, single buffered']
    %10 = vsyncpa [#allocation3], 0
    %11 = vsyncpa [#allocation6], 0
    %12 = vsyncpa [#allocation4], 0
    // Predicated region
    $region2: #{decoder_forward.1} parent=1 // pred_check
      _
    $region3: #{decoder_forward.1} parent=1 // pred_check_branch
      %14 = sbr.rel (0) target = $region5
    $region4: #{decoder_forward.1} parent=1 // pred_region
      %s16 = ssub.s32 32, 32
      %17 = vsyncadd [#allocation3], %s16
      %s19 = sshll.u32 [#allocation2], 4
      %s20 = int_to_ptr.vmem [resolvable:$true] %s19
      %22 = dma.hbm_to_vmem [thread:$0]  %s0, 32, %s20, [#allocation3]
    $region5: #{decoder_forward.1} parent=1 // pred_fallthru
      _
    // Predicated region
    $region6: #{decoder_forward.1} parent=1 // pred_check
      _
    $region7: #{decoder_forward.1} parent=1 // pred_check_branch
      %24 = sbr.rel (0) target = $region9
    $region8: #{decoder_forward.1} parent=1 // pred_region
      %s26 = ssub.s32 128, 128
      %27 = vsyncadd [#allocation6], %s26
      %s29 = sshll.u32 [#allocation5], 4
      %s30 = int_to_ptr.vmem [resolvable:$true] %s29
      %32 = dma.hbm_to_vmem [thread:$0]  %s1, 128, %s30, [#allocation6]
    $region9: #{decoder_forward.1} parent=1 // pred_fallthru
      _
    // Predicated region
    $region10: #{decoder_forward.1} parent=1 // pred_check
      _
    $region11: #{decoder_forward.1} parent=1 // pred_check_branch
      %34 = sbr.rel (0) target = $region13
    $region12: #{decoder_forward.1} parent=1 // pred_region
      _
    $region13: #{decoder_forward.1} parent=1 // pred_fallthru
      _
    // Predicated region
    $region14: #{decoder_forward.1} parent=1 // pred_check
      _
    $region15: #{decoder_forward.1} parent=1 // pred_check_branch
      %36 = sbr.rel (0) target = $region17
    $region16: #{decoder_forward.1} parent=1 // pred_region
      %s38 = ssub.s32 2688, 2688
      %39 = vsyncadd [#allocation6], %s38
      %s40 = sshll.u32 [#allocation7], 4
      %s41 = int_to_ptr.vmem [resolvable:$true] %s40
      %46 = dma.hbm_to_vmem [thread:$0]  %s3, 2688, %s41, [#allocation6], 896, 896, 56
    $region17: #{decoder_forward.1} parent=1 // pred_fallthru
      _
    // Predicated region
    $region18: #{decoder_forward.1} parent=1 // pred_check
      _
    $region19: #{decoder_forward.1} parent=1 // pred_check_branch
      %48 = sbr.rel (0) target = $region21
    $region20: #{decoder_forward.1} parent=1 // pred_region
      _
    $region21: #{decoder_forward.1} parent=1 // pred_fallthru
      _
    // Predicated region
    $region22: #{decoder_forward.1} parent=1 // pred_check
      _
    $region23: #{decoder_forward.1} parent=1 // pred_check_branch
      %50 = sbr.rel (0) target = $region25
    $region24: #{decoder_forward.1} parent=1 // pred_region
      %51 = dma.done [#allocation3], 32
    $region25: #{decoder_forward.1} parent=1 // pred_fallthru
      _
    // Predicated region
    $region26: #{decoder_forward.1} parent=1 // pred_check
      _
    $region27: #{decoder_forward.1} parent=1 // pred_check_branch
      %53 = sbr.rel (0) target = $region29
    $region28: #{decoder_forward.1} parent=1 // pred_region
      %54 = dma.done [#allocation6], 128
    $region29: #{decoder_forward.1} parent=1 // pred_fallthru
      _
    // Predicated region
    $region30: #{decoder_forward.1} parent=1 // pred_check
      _
    $region31: #{decoder_forward.1} parent=1 // pred_check_branch
      %56 = sbr.rel (0) target = $region33
    $region32: #{decoder_forward.1} parent=1 // pred_region
      %57 = dma.done [#allocation6], 2688
    $region33: #{decoder_forward.1} parent=1 // pred_fallthru
      _
    %v58 = vld [vmem:[#allocation2] sm:$0x3]
    %v59 = vld [vmem:[#allocation5] sm:$0xff]
    %v60 = vld [vmem:[%s2] sm:$0x1]
    %v62 = vlaneseq
    %v63 = vshrl.u32 %v62, 7
    %v64 = vsub.s32 0, %v63
    %v65 = vrot.slane %v60, %v64
    %vm67 = vcmask 64512
    %v69 = vsel %vm67, %v58, 0
    %71 = vmatprep.subr.mxu0 0.0
    %72 = vmatpush1.msra.mxu0 %v59
    %73 = vmatprep.subr.mxu0 0.0
    %74 = vmatpush1.msra.mxu0 0.0
    %75 = vmatprep.subr.mxu0 0.0
    %76 = vmatpush1.msra.mxu0 0.0
    %77 = vmatprep.subr.mxu0 0.0
    %78 = vmatpush1.msra.mxu0 0.0
    %79 = vmatprep.subr.mxu0 0.0
    %80 = vmatpush1.msra.mxu0 0.0
    %81 = vmatprep.subr.mxu0 0.0
    %82 = vmatpush1.msra.mxu0 0.0
    %83 = vmatprep.subr.mxu0 0.0
    %84 = vmatpush1.msra.mxu0 0.0
    %85 = vmatprep.subr.mxu0 0.0
    %86 = vmatpush1.msra.mxu0 0.0
    %87 = vmatprep.subr.mxu0 0.0
    %88 = vmatpush1.msra.mxu0 0.0
    %89 = vmatprep.subr.mxu0 0.0
    %90 = vmatpush1.msra.mxu0 0.0
    %91 = vmatprep.subr.mxu0 0.0
    %92 = vmatpush1.msra.mxu0 0.0
    %93 = vmatprep.subr.mxu0 0.0
    %94 = vmatpush1.msra.mxu0 0.0
    %95 = vmatprep.subr.mxu0 0.0
    %96 = vmatpush1.msra.mxu0 0.0
    %97 = vmatprep.subr.mxu0 0.0
    %98 = vmatpush1.msra.mxu0 0.0
    %99 = vmatprep.subr.mxu0 0.0
    %100 = vmatpush1.msra.mxu0 0.0
    %101 = vmatprep.subr.mxu0 0.0
    %102 = vmatpush1.msra.mxu0 0.0
    %103 = vmatprep.subr.mxu0 0.0
    %104 = vmatpush1.msra.mxu0 0.0
    %105 = vmatprep.subr.mxu0 0.0
    %106 = vmatpush1.msra.mxu0 0.0
    %107 = vmatprep.subr.mxu0 0.0
    %108 = vmatpush1.msra.mxu0 0.0
    %109 = vmatprep.subr.mxu0 0.0
    %110 = vmatpush1.msra.mxu0 0.0
    %111 = vmatprep.subr.mxu0 0.0
    %112 = vmatpush1.msra.mxu0 0.0
    %113 = vmatprep.subr.mxu0 0.0
    %114 = vmatpush1.msra.mxu0 0.0
    %115 = vmatprep.subr.mxu0 0.0
    %116 = vmatpush1.msra.mxu0 0.0
    %117 = vmatprep.subr.mxu0 0.0
    %118 = vmatpush1.msra.mxu0 0.0
    %119 = vmatprep.subr.mxu0 0.0
    %120 = vmatpush1.msra.mxu0 0.0
    %121 = vmatprep.subr.mxu0 0.0
    %122 = vmatpush1.msra.mxu0 0.0
    %123 = vmatprep.subr.mxu0 0.0
    %124 = vmatpush1.msra.mxu0 0.0
    %125 = vmatprep.subr.mxu0 0.0
    %126 = vmatpush1.msra.mxu0 0.0
    %127 = vmatprep.subr.mxu0 0.0
    %128 = vmatpush1.msra.mxu0 0.0
    %129 = vmatprep.subr.mxu0 0.0
    %130 = vmatpush1.msra.mxu0 0.0
    %131 = vmatprep.subr.mxu0 0.0
    %132 = vmatpush1.msra.mxu0 0.0
    %133 = vmatprep.subr.mxu0 0.0
    %134 = vmatpush1.msra.mxu0 0.0
    %135 = vmatprep.mubr.f32.mxu0 0.0
    %136 = vmatmul.mubr.f32.gmra.mrb[0].mxu0 %v69
    %v137 = vpop.f32.mrb[0].mxu0
    %v138 = vadd.f32 %v65, %v137
    %v139 = vpop.f32.mrb[0].mxu0
    %140 = vdwg.mxu0
    %v141 = vmax.f32 %v138, 0.0
    %v142 = vld [vmem:[#allocation7] sm:$0xff]
    %v143 = vld [vmem:[#allocation7 + $0x8] sm:$0xff]
    %v144 = vld [vmem:[#allocation7 + $0x10] sm:$0xff]
    %v145 = vld [vmem:[#allocation7 + $0x18] sm:$0xff]
    %v146 = vld [vmem:[#allocation7 + $0x20] sm:$0xff]
    %v147 = vld [vmem:[#allocation7 + $0x28] sm:$0xff]
    %v148 = vld [vmem:[#allocation7 + $0x30] sm:$0xff]
    %v149 = vld [vmem:[#allocation7 + $0x38] sm:$0xff]
    %v150 = vld [vmem:[#allocation7 + $0x40] sm:$0xff]
    %v151 = vld [vmem:[#allocation7 + $0x48] sm:$0xff]
    %v152 = vld [vmem:[#allocation7 + $0x50] sm:$0xff]
    %v153 = vld [vmem:[#allocation7 + $0x58] sm:$0xff]
    %v154 = vld [vmem:[#allocation7 + $0x60] sm:$0xff]
    %v155 = vld [vmem:[#allocation7 + $0x68] sm:$0xff]
    %v156 = vld [vmem:[#allocation7 + $0x70] sm:$0xff]
    %v157 = vld [vmem:[#allocation7 + $0x78] sm:$0xff]
    %v158 = vld [vmem:[#allocation7 + $0x80] sm:$0xff]
    %v159 = vld [vmem:[#allocation7 + $0x88] sm:$0xff]
    %v160 = vld [vmem:[#allocation7 + $0x90] sm:$0xff]
    %v161 = vld [vmem:[#allocation7 + $0x98] sm:$0xff]
    %v162 = vld [vmem:[#allocation7 + $0xa0] sm:$0xff]
    %v163 = vld [vmem:[%s4] sm:$0x7f]
    %v165 = vlaneseq
    %v166 = vshrl.u32 %v165, 7
    %v167 = vsub.s32 0, %v166
    %v168 = vrot.slane %v163, %v167
    %v169 = vlaneseq
    %v170 = vshrl.u32 %v169, 7
    %v171 = vsub.s32 1, %v170
    %v172 = vrot.slane %v163, %v171
    %v173 = vlaneseq
    %v174 = vshrl.u32 %v173, 7
    %v175 = vsub.s32 2, %v174
    %v176 = vrot.slane %v163, %v175
    %v177 = vlaneseq
    %v178 = vshrl.u32 %v177, 7
    %v179 = vsub.s32 3, %v178
    %v180 = vrot.slane %v163, %v179
    %v181 = vlaneseq
    %v182 = vshrl.u32 %v181, 7
    %v183 = vsub.s32 4, %v182
    %v184 = vrot.slane %v163, %v183
    %v185 = vlaneseq
    %v186 = vshrl.u32 %v185, 7
    %v187 = vsub.s32 5, %v186
    %v188 = vrot.slane %v163, %v187
    %v189 = vlaneseq
    %v190 = vshrl.u32 %v189, 7
    %v191 = vsub.s32 6, %v190
    %v192 = vrot.slane %v163, %v191
    %vm200 = vcmask 195584
    %v202 = vsel %vm200, %v141, 0
    %204 = vmatprep.subr.mxu0 %v143
    %205 = vmatpush1.msra.mxu0 %v142
    %206 = vmatprep.subr.mxu0 %v150
    %207 = vmatpush1.msra.mxu0 %v149
    %208 = vmatprep.subr.mxu0 %v157
    %209 = vmatpush1.msra.mxu0 %v156
    %210 = vmatprep.subr.mxu0 0.0
    %211 = vmatpush1.msra.mxu0 0.0
    %212 = vmatprep.subr.mxu0 0.0
    %213 = vmatpush1.msra.mxu0 0.0
    %214 = vmatprep.subr.mxu0 0.0
    %215 = vmatpush1.msra.mxu0 0.0
    %216 = vmatprep.subr.mxu0 0.0
    %217 = vmatpush1.msra.mxu0 0.0
    %218 = vmatprep.subr.mxu0 0.0
    %219 = vmatpush1.msra.mxu0 0.0
    %220 = vmatprep.subr.mxu0 0.0
    %221 = vmatpush1.msra.mxu0 0.0
    %222 = vmatprep.subr.mxu0 0.0
    %223 = vmatpush1.msra.mxu0 0.0
    %224 = vmatprep.subr.mxu0 0.0
    %225 = vmatpush1.msra.mxu0 0.0
    %226 = vmatprep.subr.mxu0 0.0
    %227 = vmatpush1.msra.mxu0 0.0
    %228 = vmatprep.subr.mxu0 0.0
    %229 = vmatpush1.msra.mxu0 0.0
    %230 = vmatprep.subr.mxu0 0.0
    %231 = vmatpush1.msra.mxu0 0.0
    %232 = vmatprep.subr.mxu0 0.0
    %233 = vmatpush1.msra.mxu0 0.0
    %234 = vmatprep.subr.mxu0 0.0
    %235 = vmatpush1.msra.mxu0 0.0
    %236 = vmatprep.subr.mxu0 0.0
    %237 = vmatpush1.msra.mxu0 0.0
    %238 = vmatprep.subr.mxu0 0.0
    %239 = vmatpush1.msra.mxu0 0.0
    %240 = vmatprep.subr.mxu0 0.0
    %241 = vmatpush1.msra.mxu0 0.0
    %242 = vmatprep.subr.mxu0 0.0
    %243 = vmatpush1.msra.mxu0 0.0
    %244 = vmatprep.subr.mxu0 0.0
    %245 = vmatpush1.msra.mxu0 0.0
    %246 = vmatprep.subr.mxu0 0.0
    %247 = vmatpush1.msra.mxu0 0.0
    %248 = vmatprep.subr.mxu0 0.0
    %249 = vmatpush1.msra.mxu0 0.0
    %250 = vmatprep.subr.mxu0 0.0
    %251 = vmatpush1.msra.mxu0 0.0
    %252 = vmatprep.subr.mxu0 0.0
    %253 = vmatpush1.msra.mxu0 0.0
    %254 = vmatprep.subr.mxu0 0.0
    %255 = vmatpush1.msra.mxu0 0.0
    %256 = vmatprep.subr.mxu0 0.0
    %257 = vmatpush1.msra.mxu0 0.0
    %258 = vmatprep.subr.mxu0 0.0
    %259 = vmatpush1.msra.mxu0 0.0
    %260 = vmatprep.subr.mxu0 0.0
    %261 = vmatpush1.msra.mxu0 0.0
    %262 = vmatprep.subr.mxu0 0.0
    %263 = vmatpush1.msra.mxu0 0.0
    %264 = vmatprep.subr.mxu0 0.0
    %265 = vmatpush1.msra.mxu0 0.0
    %266 = vmatprep.subr.mxu0 0.0
    %267 = vmatpush1.msra.mxu0 0.0
    %268 = vmatprep.mubr.f32.mxu0 0.0
    %269 = vmatmul.mubr.f32.gmra.mrb[0].mxu0 %v202
    %v270 = vpop.f32.mrb[0].mxu0
    %v271 = vadd.f32 %v168, %v270
    %v272 = vpop.f32.mrb[0].mxu0
    %v273 = vadd.f32 %v172, %v272
    %274 = vdwg.mxu0
    %275 = vmatprep.subr.mxu0 %v145
    %276 = vmatpush1.msra.mxu0 %v144
    %277 = vmatprep.subr.mxu0 %v152
    %278 = vmatpush1.msra.mxu0 %v151
    %279 = vmatprep.subr.mxu0 %v159
    %280 = vmatpush1.msra.mxu0 %v158
    %281 = vmatprep.subr.mxu0 0.0
    %282 = vmatpush1.msra.mxu0 0.0
    %283 = vmatprep.subr.mxu0 0.0
    %284 = vmatpush1.msra.mxu0 0.0
    %285 = vmatprep.subr.mxu0 0.0
    %286 = vmatpush1.msra.mxu0 0.0
    %287 = vmatprep.subr.mxu0 0.0
    %288 = vmatpush1.msra.mxu0 0.0
    %289 = vmatprep.subr.mxu0 0.0
    %290 = vmatpush1.msra.mxu0 0.0
    %291 = vmatprep.subr.mxu0 0.0
    %292 = vmatpush1.msra.mxu0 0.0
    %293 = vmatprep.subr.mxu0 0.0
    %294 = vmatpush1.msra.mxu0 0.0
    %295 = vmatprep.subr.mxu0 0.0
    %296 = vmatpush1.msra.mxu0 0.0
    %297 = vmatprep.subr.mxu0 0.0
    %298 = vmatpush1.msra.mxu0 0.0
    %299 = vmatprep.subr.mxu0 0.0
    %300 = vmatpush1.msra.mxu0 0.0
    %301 = vmatprep.subr.mxu0 0.0
    %302 = vmatpush1.msra.mxu0 0.0
    %303 = vmatprep.subr.mxu0 0.0
    %304 = vmatpush1.msra.mxu0 0.0
    %305 = vmatprep.subr.mxu0 0.0
    %306 = vmatpush1.msra.mxu0 0.0
    %307 = vmatprep.subr.mxu0 0.0
    %308 = vmatpush1.msra.mxu0 0.0
    %309 = vmatprep.subr.mxu0 0.0
    %310 = vmatpush1.msra.mxu0 0.0
    %311 = vmatprep.subr.mxu0 0.0
    %312 = vmatpush1.msra.mxu0 0.0
    %313 = vmatprep.subr.mxu0 0.0
    %314 = vmatpush1.msra.mxu0 0.0
    %315 = vmatprep.subr.mxu0 0.0
    %316 = vmatpush1.msra.mxu0 0.0
    %317 = vmatprep.subr.mxu0 0.0
    %318 = vmatpush1.msra.mxu0 0.0
    %319 = vmatprep.subr.mxu0 0.0
    %320 = vmatpush1.msra.mxu0 0.0
    %321 = vmatprep.subr.mxu0 0.0
    %322 = vmatpush1.msra.mxu0 0.0
    %323 = vmatprep.subr.mxu0 0.0
    %324 = vmatpush1.msra.mxu0 0.0
    %325 = vmatprep.subr.mxu0 0.0
    %326 = vmatpush1.msra.mxu0 0.0
    %327 = vmatprep.subr.mxu0 0.0
    %328 = vmatpush1.msra.mxu0 0.0
    %329 = vmatprep.subr.mxu0 0.0
    %330 = vmatpush1.msra.mxu0 0.0
    %331 = vmatprep.subr.mxu0 0.0
    %332 = vmatpush1.msra.mxu0 0.0
    %333 = vmatprep.subr.mxu0 0.0
    %334 = vmatpush1.msra.mxu0 0.0
    %335 = vmatprep.subr.mxu0 0.0
    %336 = vmatpush1.msra.mxu0 0.0
    %337 = vmatprep.subr.mxu0 0.0
    %338 = vmatpush1.msra.mxu0 0.0
    %339 = vmatprep.mubr.f32.mxu0 0.0
    %340 = vmatmul.mubr.f32.gmra.mrb[0].mxu0 %v202
    %v341 = vpop.f32.mrb[0].mxu0
    %v342 = vadd.f32 %v176, %v341
    %v343 = vpop.f32.mrb[0].mxu0
    %v344 = vadd.f32 %v180, %v343
    %345 = vdwg.mxu0
    %346 = vmatprep.subr.mxu0 %v147
    %347 = vmatpush1.msra.mxu0 %v146
    %348 = vmatprep.subr.mxu0 %v154
    %349 = vmatpush1.msra.mxu0 %v153
    %350 = vmatprep.subr.mxu0 %v161
    %351 = vmatpush1.msra.mxu0 %v160
    %352 = vmatprep.subr.mxu0 0.0
    %353 = vmatpush1.msra.mxu0 0.0
    %354 = vmatprep.subr.mxu0 0.0
    %355 = vmatpush1.msra.mxu0 0.0
    %356 = vmatprep.subr.mxu0 0.0
    %357 = vmatpush1.msra.mxu0 0.0
    %358 = vmatprep.subr.mxu0 0.0
    %359 = vmatpush1.msra.mxu0 0.0
    %360 = vmatprep.subr.mxu0 0.0
    %361 = vmatpush1.msra.mxu0 0.0
    %362 = vmatprep.subr.mxu0 0.0
    %363 = vmatpush1.msra.mxu0 0.0
    %364 = vmatprep.subr.mxu0 0.0
    %365 = vmatpush1.msra.mxu0 0.0
    %366 = vmatprep.subr.mxu0 0.0
    %367 = vmatpush1.msra.mxu0 0.0
    %368 = vmatprep.subr.mxu0 0.0
    %369 = vmatpush1.msra.mxu0 0.0
    %370 = vmatprep.subr.mxu0 0.0
    %371 = vmatpush1.msra.mxu0 0.0
    %372 = vmatprep.subr.mxu0 0.0
    %373 = vmatpush1.msra.mxu0 0.0
    %374 = vmatprep.subr.mxu0 0.0
    %375 = vmatpush1.msra.mxu0 0.0
    %376 = vmatprep.subr.mxu0 0.0
    %377 = vmatpush1.msra.mxu0 0.0
    %378 = vmatprep.subr.mxu0 0.0
    %379 = vmatpush1.msra.mxu0 0.0
    %380 = vmatprep.subr.mxu0 0.0
    %381 = vmatpush1.msra.mxu0 0.0
    %382 = vmatprep.subr.mxu0 0.0
    %383 = vmatpush1.msra.mxu0 0.0
    %384 = vmatprep.subr.mxu0 0.0
    %385 = vmatpush1.msra.mxu0 0.0
    %386 = vmatprep.subr.mxu0 0.0
    %387 = vmatpush1.msra.mxu0 0.0
    %388 = vmatprep.subr.mxu0 0.0
    %389 = vmatpush1.msra.mxu0 0.0
    %390 = vmatprep.subr.mxu0 0.0
    %391 = vmatpush1.msra.mxu0 0.0
    %392 = vmatprep.subr.mxu0 0.0
    %393 = vmatpush1.msra.mxu0 0.0
    %394 = vmatprep.subr.mxu0 0.0
    %395 = vmatpush1.msra.mxu0 0.0
    %396 = vmatprep.subr.mxu0 0.0
    %397 = vmatpush1.msra.mxu0 0.0
    %398 = vmatprep.subr.mxu0 0.0
    %399 = vmatpush1.msra.mxu0 0.0
    %400 = vmatprep.subr.mxu0 0.0
    %401 = vmatpush1.msra.mxu0 0.0
    %402 = vmatprep.subr.mxu0 0.0
    %403 = vmatpush1.msra.mxu0 0.0
    %404 = vmatprep.subr.mxu0 0.0
    %405 = vmatpush1.msra.mxu0 0.0
    %406 = vmatprep.subr.mxu0 0.0
    %407 = vmatpush1.msra.mxu0 0.0
    %408 = vmatprep.subr.mxu0 0.0
    %409 = vmatpush1.msra.mxu0 0.0
    %410 = vmatprep.mubr.f32.mxu0 0.0
    %411 = vmatmul.mubr.f32.gmra.mrb[0].mxu0 %v202
    %v412 = vpop.f32.mrb[0].mxu0
    %v413 = vadd.f32 %v184, %v412
    %v414 = vpop.f32.mrb[0].mxu0
    %v415 = vadd.f32 %v188, %v414
    %416 = vdwg.mxu0
    %417 = vmatprep.subr.mxu0 0.0
    %418 = vmatpush1.msra.mxu0 %v148
    %419 = vmatprep.subr.mxu0 0.0
    %420 = vmatpush1.msra.mxu0 %v155
    %421 = vmatprep.subr.mxu0 0.0
    %422 = vmatpush1.msra.mxu0 %v162
    %423 = vmatprep.subr.mxu0 0.0
    %424 = vmatpush1.msra.mxu0 0.0
    %425 = vmatprep.subr.mxu0 0.0
    %426 = vmatpush1.msra.mxu0 0.0
    %427 = vmatprep.subr.mxu0 0.0
    %428 = vmatpush1.msra.mxu0 0.0
    %429 = vmatprep.subr.mxu0 0.0
    %430 = vmatpush1.msra.mxu0 0.0
    %431 = vmatprep.subr.mxu0 0.0
    %432 = vmatpush1.msra.mxu0 0.0
    %433 = vmatprep.subr.mxu0 0.0
    %434 = vmatpush1.msra.mxu0 0.0
    %435 = vmatprep.subr.mxu0 0.0
    %436 = vmatpush1.msra.mxu0 0.0
    %437 = vmatprep.subr.mxu0 0.0
    %438 = vmatpush1.msra.mxu0 0.0
    %439 = vmatprep.subr.mxu0 0.0
    %440 = vmatpush1.msra.mxu0 0.0
    %441 = vmatprep.subr.mxu0 0.0
    %442 = vmatpush1.msra.mxu0 0.0
    %443 = vmatprep.subr.mxu0 0.0
    %444 = vmatpush1.msra.mxu0 0.0
    %445 = vmatprep.subr.mxu0 0.0
    %446 = vmatpush1.msra.mxu0 0.0
    %447 = vmatprep.subr.mxu0 0.0
    %448 = vmatpush1.msra.mxu0 0.0
    %449 = vmatprep.subr.mxu0 0.0
    %450 = vmatpush1.msra.mxu0 0.0
    %451 = vmatprep.subr.mxu0 0.0
    %452 = vmatpush1.msra.mxu0 0.0
    %453 = vmatprep.subr.mxu0 0.0
    %454 = vmatpush1.msra.mxu0 0.0
    %455 = vmatprep.subr.mxu0 0.0
    %456 = vmatpush1.msra.mxu0 0.0
    %457 = vmatprep.subr.mxu0 0.0
    %458 = vmatpush1.msra.mxu0 0.0
    %459 = vmatprep.subr.mxu0 0.0
    %460 = vmatpush1.msra.mxu0 0.0
    %461 = vmatprep.subr.mxu0 0.0
    %462 = vmatpush1.msra.mxu0 0.0
    %463 = vmatprep.subr.mxu0 0.0
    %464 = vmatpush1.msra.mxu0 0.0
    %465 = vmatprep.subr.mxu0 0.0
    %466 = vmatpush1.msra.mxu0 0.0
    %467 = vmatprep.subr.mxu0 0.0
    %468 = vmatpush1.msra.mxu0 0.0
    %469 = vmatprep.subr.mxu0 0.0
    %470 = vmatpush1.msra.mxu0 0.0
    %471 = vmatprep.subr.mxu0 0.0
    %472 = vmatpush1.msra.mxu0 0.0
    %473 = vmatprep.subr.mxu0 0.0
    %474 = vmatpush1.msra.mxu0 0.0
    %475 = vmatprep.subr.mxu0 0.0
    %476 = vmatpush1.msra.mxu0 0.0
    %477 = vmatprep.subr.mxu0 0.0
    %478 = vmatpush1.msra.mxu0 0.0
    %479 = vmatprep.subr.mxu0 0.0
    %480 = vmatpush1.msra.mxu0 0.0
    %481 = vmatprep.mubr.f32.mxu0 0.0
    %482 = vmatmul.mubr.f32.gmra.mrb[0].mxu0 %v202
    %v483 = vpop.f32.mrb[0].mxu0
    %v484 = vadd.f32 %v192, %v483
    %v485 = vpop.f32.mrb[0].mxu0
    %486 = vdwg.mxu0
    %v487 = vmul.f32 %v271, 0.25
    %v488 = vmul.f32 %v273, 0.25
    %v489 = vmul.f32 %v342, 0.25
    %v490 = vmul.f32 %v344, 0.25
    %v491 = vmul.f32 %v413, 0.25
    %v492 = vmul.f32 %v415, 0.25
    %v493 = vmul.f32 %v484, 0.25
    %v494 = vadd.f32 %v487, 0.5
    %v495 = vadd.f32 %v488, 0.5
    %v496 = vadd.f32 %v489, 0.5
    %v497 = vadd.f32 %v490, 0.5
    %v498 = vadd.f32 %v491, 0.5
    %v499 = vadd.f32 %v492, 0.5
    %v500 = vadd.f32 %v493, 0.5
    %v501 = vmax.f32 %v494, 0.0
    %v502 = vmax.f32 %v495, 0.0
    %v503 = vmax.f32 %v496, 0.0
    %v504 = vmax.f32 %v497, 0.0
    %v505 = vmax.f32 %v498, 0.0
    %v506 = vmax.f32 %v499, 0.0
    %v507 = vmax.f32 %v500, 0.0
    %v508 = vmin.f32 %v501, 1.0
    %v509 = vmin.f32 %v502, 1.0
    %v510 = vmin.f32 %v503, 1.0
    %v511 = vmin.f32 %v504, 1.0
    %v512 = vmin.f32 %v505, 1.0
    %v513 = vmin.f32 %v506, 1.0
    %v514 = vmin.f32 %v507, 1.0
    %v522 = vcombine.low %v508, %v509
    %v523 = vcombine.low %v510, %v511
    %v525 = vunpack.c.l.s4 1983009808
    %v526 = vunpack.c.0.s8 %v525
    %v527 = vlaneseq
    %v528 = vshrl.u32 %v527, 7
    %v529 = vsub.s32 %v526, %v528
    %v530 = vrot.slane %v522, %v529
    %v532 = vunpack.c.l.s4 1983009808
    %v533 = vunpack.c.0.s8 %v532
    %v534 = vlaneseq
    %v535 = vshrl.u32 %v534, 7
    %v536 = vsub.s32 %v533, %v535
    %v537 = vrot.slane %v523, %v536
    %v538 = vcombine.low %v530, %v537
    %v539 = vcombine.low %v512, %v513
    %v541 = vunpack.c.l.s4 1983009808
    %v542 = vunpack.c.0.s8 %v541
    %v543 = vlaneseq
    %v544 = vshrl.u32 %v543, 7
    %v545 = vsub.s32 %v542, %v544
    %v546 = vrot.slane %v539, %v545
    %v548 = vunpack.c.l.s4 1983009808
    %v549 = vunpack.c.0.s8 %v548
    %v550 = vlaneseq
    %v551 = vshrl.u32 %v550, 7
    %v552 = vsub.s32 %v549, %v551
    %v553 = vrot.slane %v514, %v552
    %v554 = vcombine.low %v546, %v553
    %557 = vst [vmem:[#allocation8] sm:$0xff] %v538
    %vm558 = vcmask 1041408
    %vm559 = vcmask 1043458
    %vm560 = vmor %vm559, %vm558
    %vm561 = vcmask 128004
    %vm562 = vmor %vm561, %vm560
    %563 = vst.msk [vmem:[#allocation8 + $0x8] sm:$0x3f] %vm562, %v554
    // Predicated region
    $region34: #{decoder_forward.1} parent=1 // pred_check
      _
    $region35: #{decoder_forward.1} parent=1 // pred_check_branch
      %565 = sbr.rel (0) target = $region37
    $region36: #{decoder_forward.1} parent=1 // pred_region
      %s567 = ssub.s32 224, 224
      %568 = vsyncadd [#allocation4], %s567
      %s570 = sshll.u32 [#allocation8], 4
      %s571 = int_to_ptr.vmem [resolvable:$true] %s570
      %573 = dma.vmem_to_hbm [thread:$0]  %s571, 224, %s5, [#allocation4]
    $region37: #{decoder_forward.1} parent=1 // pred_fallthru
      _
    // Predicated region
    $region38: #{decoder_forward.1} parent=1 // pred_check
      _
    $region39: #{decoder_forward.1} parent=1 // pred_check_branch
      %575 = sbr.rel (0) target = $region41
    $region40: #{decoder_forward.1} parent=1 // pred_region
      %576 = dma.done [#allocation4], 224
    $region41: #{decoder_forward.1} parent=1 // pred_fallthru
      _
    %577 = vsyncpa [#allocation3], 1
    %578 = vsyncpa [#allocation6], 1
    %579 = vsyncpa [#allocation4], 1

</llo_original>
